<compile_context>
chip_gen: v6e
topology: v6e:2x2x1
jax: 0.10.0
libtpu: 0.0.40
codegen_flags: <defaults>
</compile_context>

<pallas_src>
import jax
import jax.numpy as jnp
from jax.experimental import pallas as pl
from jax.experimental.pallas import tpu as pltpu

H = 100  # hidden width of both encoder and decoder


def _elu(x):
    # ELU(alpha=1). Negative branch as one EUP push (exp) + one VPU add; the min()
    # clamp keeps the always-evaluated branch from computing exp of large positives.
    return jnp.where(x > 0, x, jnp.exp(jnp.minimum(x, 0.0)) - 1.0)


def ae_kernel(x_ref, w1e_ref, b1e_ref, w2e_ref, b2e_ref,
              w1d_ref, b1d_ref, w2d_ref, b2d_ref, o_ref):
    # Batch-on-lanes layout: x (2, TN), hidden activations (100, TN), out (2, TN).
    x = x_ref[...]                                   # (2, TN) f32

    # ---- Encoder Linear(2, 100): K=2 -> two VPU broadcast FMAs (skip MXU) ----
    w1e = w1e_ref[...]                               # (100, 2)
    h = (w1e[:, 0:1] * x[0:1, :]
         + w1e[:, 1:2] * x[1:2, :]
         + b1e_ref[...])                             # (100, TN)
    h = _elu(h)

    # ---- Encoder Linear(100, 1): width-1 output -> VPU mul + XLU sublane reduce ----
    z = jnp.sum(h * w2e_ref[...], axis=0, keepdims=True) + b2e_ref[...]   # (1, TN)

    # ---- Decoder Linear(1, 100): K=1 -> VPU broadcast ----
    h2 = _elu(w1d_ref[...] * z + b1d_ref[...])                            # (100, TN)

    # ---- Decoder Linear(100, 2): real matmul (K=100, lane-dense N) -> MXU ----
    # (MXU / vector-extended slot is otherwise idle; on v5e this f32 matmul is
    #  decomposed but the kernel stays EUP-bound, so it remains off the critical path.)
    out = jnp.dot(w2d_ref[...], h2, preferred_element_type=jnp.float32)   # (2, TN)
    o_ref[...] = out + b2d_ref[...]                  # already f32, no astype


def ae_forward(x, params, *, tile_n=8192):
    """x: (N, 2); params in PyTorch Linear layout (W: (out,in), b: (out,)).
    Returns (N, 2) float32."""
    (w1e, b1e), (w2e, b2e), (w1d, b1d), (w2d, b2d) = params
    N = x.shape[0]

    # ---- Tile / grid selection ------------------------------------------------
    # * cap the lane tile at `tile_n` (default 8192: amortizes per-step overhead,
    #   per-step VMEM stays ~15-20 MiB, safe under v7x's 64 MiB)
    # * keep >= 2 grid steps when the batch allows it so the "parallel" axis can
    #   shard across both TensorCores on v7x
    # * size the tile to N so tail-padding waste stays small in this compute-bound
    #   kernel.
    n128 = 128 * pl.cdiv(N, 128)                 # batch rounded to whole vregs
    g = max(1, pl.cdiv(n128, tile_n))            # number of grid steps for the cap
    if g == 1 and n128 > 128:
        g = 2                                    # give v7x's second TC some work
    tn = 128 * pl.cdiv(pl.cdiv(N, g), 128)       # lane tile, multiple of 128
    n_pad = tn * g
    grid = (g,)

    # Batch-on-lanes layout; pad fused into the transpose (single HLO).
    x_t = jnp.pad(x.astype(jnp.float32).T, ((0, 0), (0, n_pad - N)))

    # Kernel-side weight layouts (tiny; kept resident in VMEM for every step).
    w1e_k = w1e.astype(jnp.float32)                   # (100, 2)
    b1e_k = b1e.astype(jnp.float32).reshape(H, 1)     # (100, 1)
    w2e_k = w2e.astype(jnp.float32).reshape(H, 1)     # (100, 1) (torch W is (1,100))
    b2e_k = b2e.astype(jnp.float32).reshape(1, 1)     # (1, 1)
    w1d_k = w1d.astype(jnp.float32)                   # (100, 1)
    b1d_k = b1d.astype(jnp.float32).reshape(H, 1)     # (100, 1)
    w2d_k = w2d.astype(jnp.float32)                   # (2, 100)
    b2d_k = b2d.astype(jnp.float32).reshape(2, 1)     # (2, 1)

    const = lambda shape: pl.BlockSpec(shape, lambda i: (0, 0))

    # Advisory cost: ~1200 flops, ~200 transcendentals, ~16 bytes per (padded) sample.
    cost = pl.CostEstimate(flops=1200 * n_pad,
                           transcendentals=200 * n_pad,
                           bytes_accessed=16 * n_pad)

    out_t = pl.pallas_call(
        ae_kernel,
        out_shape=jax.ShapeDtypeStruct((2, n_pad), jnp.float32),
        grid=grid,
        in_specs=[
            pl.BlockSpec((2, tn), lambda i: (0, i)),   # x, batch-tiled on lanes
            const((H, 2)), const((H, 1)),              # encoder linear1 (W, b)
            const((H, 1)), const((1, 1)),              # encoder linear2 (W, b)
            const((H, 1)), const((H, 1)),              # decoder linear1 (W, b)
            const((2, H)), const((2, 1)),              # decoder linear2 (W, b)
        ],
        out_specs=pl.BlockSpec((2, tn), lambda i: (0, i)),
        compiler_params=pltpu.CompilerParams(
            dimension_semantics=("parallel",),
            vmem_limit_bytes=48 * 1024 * 1024),
        cost_estimate=cost,
    )(x_t, w1e_k, b1e_k, w2e_k, b2e_k, w1d_k, b1d_k, w2d_k, b2d_k)

    # TODO(synk): if the surrounding model can consume/produce the (2, N)
    # batch-on-lanes layout directly, both transposes can be dropped.
    return out_t[:, :N].T


def init_params(key):
    """PyTorch nn.Linear-style init: U(-1/sqrt(fan_in), 1/sqrt(fan_in)).
    Weights stored as (out_features, in_features); biases as (out_features,)."""
    def linear(key, fan_in, fan_out):
        kw, kb = jax.random.split(key)
        bound = 1.0 / jnp.sqrt(jnp.float32(fan_in))
        w = jax.random.uniform(kw, (fan_out, fan_in), jnp.float32, -bound, bound)
        b = jax.random.uniform(kb, (fan_out,), jnp.float32, -bound, bound)
        return w, b

    k1, k2, k3, k4 = jax.random.split(key, 4)
    return (linear(k1, 2, H),    # encoder.linear1
            linear(k2, H, 1),    # encoder.linear2
            linear(k3, 1, H),    # decoder.linear1
            linear(k4, H, 2))    # decoder.linear2


def ae_reference(x, params):
    """Pure-JAX reference matching the PyTorch forward exactly."""
    (w1e, b1e), (w2e, b2e), (w1d, b1d), (w2d, b2d) = params

    def elu(v):
        return jnp.where(v > 0, v, jnp.expm1(jnp.minimum(v, 0.0)))

    h = elu(x @ w1e.T + b1e)
    z = h @ w2e.T + b2e
    h2 = elu(z @ w1d.T + b1d)
    return h2 @ w2d.T + b2d


if __name__ == "__main__":
    key = jax.random.PRNGKey(0)
    kx, kp = jax.random.split(key)
    params = init_params(kp)

    # Small case (single grid step, padded to one 128-lane tile).
    x_small = jax.random.normal(kx, (8, 2), dtype=jnp.float32)
    out_small = jax.block_until_ready(ae_forward(x_small, params))
    ref_small = ae_reference(x_small, params)
    assert out_small.shape == (8, 2)
    assert jnp.allclose(out_small, ref_small, atol=1e-4, rtol=1e-4), \
        "small-batch mismatch vs reference"

    # Multi-tile case (exercises the batch grid, >=2 steps, tail padding).
    x_big = jax.random.normal(kx, (333, 2), dtype=jnp.float32)
    out_big = jax.block_until_ready(ae_forward(x_big, params, tile_n=128))
    ref_big = ae_reference(x_big, params)
    assert out_big.shape == (333, 2)
    assert jnp.allclose(out_big, ref_big, atol=1e-4, rtol=1e-4), \
        "tiled-batch mismatch vs reference"

    # Default large-tile path (tile sized to N, grid split in two for dual-TC v7x).
    x_mid = jax.random.normal(kx, (1000, 2), dtype=jnp.float32)
    out_mid = jax.block_until_ready(ae_forward(x_mid, params))
    ref_mid = ae_reference(x_mid, params)
    assert out_mid.shape == (1000, 2)
    assert jnp.allclose(out_mid, ref_mid, atol=1e-4, rtol=1e-4), \
        "default-tile mismatch vs reference"

    print("KERNEL_OK")
</pallas_src>

<mosaic_0001>
module attributes {stable_mosaic.version = 11 : i64} {
  func.func @ae_kernel(%arg0: i32, %arg1: memref<2x128xf32, #tpu.memory_space<vmem>>, %arg2: memref<100x2xf32, #tpu.memory_space<vmem>>, %arg3: memref<100x1xf32, #tpu.memory_space<vmem>>, %arg4: memref<100x1xf32, #tpu.memory_space<vmem>>, %arg5: memref<1x1xf32, #tpu.memory_space<vmem>>, %arg6: memref<100x1xf32, #tpu.memory_space<vmem>>, %arg7: memref<100x1xf32, #tpu.memory_space<vmem>>, %arg8: memref<2x100xf32, #tpu.memory_space<vmem>>, %arg9: memref<2x1xf32, #tpu.memory_space<vmem>>, %arg10: memref<2x128xf32, #tpu.memory_space<vmem>>) attributes {dimension_semantics = [#tpu.dimension_semantics<parallel>], iteration_bounds = array<i64: 1>, scalar_prefetch = 0 : i64, scratch_operands = 0 : i64, tpu.core_type = #tpu.core_type<tc>, window_params = [{transform_indices = @transform_0, window_bounds = array<i64: 2, 128>}, {pipeline_mode = #tpu.pipeline_mode<synchronous>, transform_indices = @transform_1, window_bounds = array<i64: 100, 2>}, {pipeline_mode = #tpu.pipeline_mode<synchronous>, transform_indices = @transform_2, window_bounds = array<i64: 100, 1>}, {pipeline_mode = #tpu.pipeline_mode<synchronous>, transform_indices = @transform_3, window_bounds = array<i64: 100, 1>}, {pipeline_mode = #tpu.pipeline_mode<synchronous>, transform_indices = @transform_4, window_bounds = array<i64: 1, 1>}, {pipeline_mode = #tpu.pipeline_mode<synchronous>, transform_indices = @transform_5, window_bounds = array<i64: 100, 1>}, {pipeline_mode = #tpu.pipeline_mode<synchronous>, transform_indices = @transform_6, window_bounds = array<i64: 100, 1>}, {pipeline_mode = #tpu.pipeline_mode<synchronous>, transform_indices = @transform_7, window_bounds = array<i64: 2, 100>}, {pipeline_mode = #tpu.pipeline_mode<synchronous>, transform_indices = @transform_8, window_bounds = array<i64: 2, 1>}, {transform_indices = @transform_9, window_bounds = array<i64: 2, 128>}]} {
    %c0 = arith.constant 0 : index
    %c0_0 = arith.constant 0 : index
    %0 = vector.load %arg1[%c0, %c0_0] : memref<2x128xf32, #tpu.memory_space<vmem>>, vector<2x128xf32>
    %c0_1 = arith.constant 0 : index
    %c0_2 = arith.constant 0 : index
    %1 = vector.load %arg2[%c0_1, %c0_2] : memref<100x2xf32, #tpu.memory_space<vmem>>, vector<100x2xf32>
    %2 = vector.extract_strided_slice %1 {offsets = [0, 0], sizes = [100, 1], strides = [1, 1]} : vector<100x2xf32> to vector<100x1xf32>
    %3 = vector.extract_strided_slice %0 {offsets = [0, 0], sizes = [1, 128], strides = [1, 1]} : vector<2x128xf32> to vector<1x128xf32>
    %4 = vector.broadcast %2 : vector<100x1xf32> to vector<100x128xf32>
    %5 = vector.broadcast %3 : vector<1x128xf32> to vector<100x128xf32>
    %6 = arith.mulf %4, %5 : vector<100x128xf32>
    %7 = vector.extract_strided_slice %1 {offsets = [0, 1], sizes = [100, 1], strides = [1, 1]} : vector<100x2xf32> to vector<100x1xf32>
    %8 = vector.extract_strided_slice %0 {offsets = [1, 0], sizes = [1, 128], strides = [1, 1]} : vector<2x128xf32> to vector<1x128xf32>
    %9 = vector.broadcast %7 : vector<100x1xf32> to vector<100x128xf32>
    %10 = vector.broadcast %8 : vector<1x128xf32> to vector<100x128xf32>
    %11 = arith.mulf %9, %10 : vector<100x128xf32>
    %12 = arith.addf %6, %11 : vector<100x128xf32>
    %c0_3 = arith.constant 0 : index
    %c0_4 = arith.constant 0 : index
    %13 = vector.load %arg3[%c0_3, %c0_4] : memref<100x1xf32, #tpu.memory_space<vmem>>, vector<100x1xf32>
    %14 = vector.broadcast %13 : vector<100x1xf32> to vector<100x128xf32>
    %15 = arith.addf %12, %14 : vector<100x128xf32>
    %cst = arith.constant 0.000000e+00 : f32
    %16 = vector.broadcast %cst : f32 to vector<100x128xf32>
    %17 = arith.cmpf ogt, %15, %16 : vector<100x128xf32>
    %cst_5 = arith.constant 0.000000e+00 : f32
    %18 = vector.broadcast %cst_5 : f32 to vector<100x128xf32>
    %19 = arith.minimumf %15, %18 : vector<100x128xf32>
    %20 = math.exp %19 : vector<100x128xf32>
    %cst_6 = arith.constant 1.000000e+00 : f32
    %21 = vector.broadcast %cst_6 : f32 to vector<100x128xf32>
    %22 = arith.subf %20, %21 : vector<100x128xf32>
    %23 = arith.select %17, %15, %22 : vector<100x128xi1>, vector<100x128xf32>
    %c0_7 = arith.constant 0 : index
    %c0_8 = arith.constant 0 : index
    %24 = vector.load %arg4[%c0_7, %c0_8] : memref<100x1xf32, #tpu.memory_space<vmem>>, vector<100x1xf32>
    %25 = vector.broadcast %24 : vector<100x1xf32> to vector<100x128xf32>
    %26 = arith.mulf %23, %25 : vector<100x128xf32>
    %cst_9 = arith.constant dense<0.000000e+00> : vector<128xf32>
    %27 = vector.multi_reduction <add>, %26, %cst_9 [0] : vector<100x128xf32> to vector<128xf32>
    %28 = vector.shape_cast %27 : vector<128xf32> to vector<1x128xf32>
    %c0_10 = arith.constant 0 : index
    %c0_11 = arith.constant 0 : index
    %29 = vector.load %arg5[%c0_10, %c0_11] : memref<1x1xf32, #tpu.memory_space<vmem>>, vector<1x1xf32>
    %30 = vector.broadcast %29 : vector<1x1xf32> to vector<1x128xf32>
    %31 = arith.addf %28, %30 : vector<1x128xf32>
    %c0_12 = arith.constant 0 : index
    %c0_13 = arith.constant 0 : index
    %32 = vector.load %arg6[%c0_12, %c0_13] : memref<100x1xf32, #tpu.memory_space<vmem>>, vector<100x1xf32>
    %33 = vector.broadcast %32 : vector<100x1xf32> to vector<100x128xf32>
    %34 = vector.broadcast %31 : vector<1x128xf32> to vector<100x128xf32>
    %35 = arith.mulf %33, %34 : vector<100x128xf32>
    %c0_14 = arith.constant 0 : index
    %c0_15 = arith.constant 0 : index
    %36 = vector.load %arg7[%c0_14, %c0_15] : memref<100x1xf32, #tpu.memory_space<vmem>>, vector<100x1xf32>
    %37 = vector.broadcast %36 : vector<100x1xf32> to vector<100x128xf32>
    %38 = arith.addf %35, %37 : vector<100x128xf32>
    %cst_16 = arith.constant 0.000000e+00 : f32
    %39 = vector.broadcast %cst_16 : f32 to vector<100x128xf32>
    %40 = arith.cmpf ogt, %38, %39 : vector<100x128xf32>
    %cst_17 = arith.constant 0.000000e+00 : f32
    %41 = vector.broadcast %cst_17 : f32 to vector<100x128xf32>
    %42 = arith.minimumf %38, %41 : vector<100x128xf32>
    %43 = math.exp %42 : vector<100x128xf32>
    %cst_18 = arith.constant 1.000000e+00 : f32
    %44 = vector.broadcast %cst_18 : f32 to vector<100x128xf32>
    %45 = arith.subf %43, %44 : vector<100x128xf32>
    %46 = arith.select %40, %38, %45 : vector<100x128xi1>, vector<100x128xf32>
    %c0_19 = arith.constant 0 : index
    %c0_20 = arith.constant 0 : index
    %47 = vector.load %arg8[%c0_19, %c0_20] : memref<2x100xf32, #tpu.memory_space<vmem>>, vector<2x100xf32>
    %cst_21 = arith.constant dense<0.000000e+00> : vector<2x128xf32>
    %48 = tpu.matmul %47, %46, %cst_21 {dimension_numbers = #tpu.dot_dimension_numbers<[1], [0], [0], [1], [0, 0, 1, 1], [], []>} : vector<2x100xf32>, vector<100x128xf32>, vector<2x128xf32> -> vector<2x128xf32>
    %c0_22 = arith.constant 0 : index
    %c0_23 = arith.constant 0 : index
    %49 = vector.load %arg9[%c0_22, %c0_23] : memref<2x1xf32, #tpu.memory_space<vmem>>, vector<2x1xf32>
    %50 = vector.broadcast %49 : vector<2x1xf32> to vector<2x128xf32>
    %51 = arith.addf %48, %50 : vector<2x128xf32>
    %c0_24 = arith.constant 0 : index
    %c0_25 = arith.constant 0 : index
    %52 = vector.load %arg10[%c0_24, %c0_25] : memref<2x128xf32, #tpu.memory_space<vmem>>, vector<2x128xf32>
    tpu.vector_store %arg10[%c0_24, %c0_25], %51 {strides = array<i32>} : memref<2x128xf32, #tpu.memory_space<vmem>>, vector<2x128xf32>,
    return
  }
  func.func @transform_0(%arg0: i32) -> (i32, i32) {
    %c0_i32 = arith.constant 0 : i32
    %c0_i32_0 = arith.constant 0 : i32
    return %c0_i32, %arg0 : i32, i32
  }
  func.func @transform_1(%arg0: i32) -> (i32, i32) {
    %c0_i32 = arith.constant 0 : i32
    %c0_i32_0 = arith.constant 0 : i32
    %c0_i32_1 = arith.constant 0 : i32
    return %c0_i32, %c0_i32_0 : i32, i32
  }
  func.func @transform_2(%arg0: i32) -> (i32, i32) {
    %c0_i32 = arith.constant 0 : i32
    %c0_i32_0 = arith.constant 0 : i32
    %c0_i32_1 = arith.constant 0 : i32
    return %c0_i32, %c0_i32_0 : i32, i32
  }
  func.func @transform_3(%arg0: i32) -> (i32, i32) {
    %c0_i32 = arith.constant 0 : i32
    %c0_i32_0 = arith.constant 0 : i32
    %c0_i32_1 = arith.constant 0 : i32
    return %c0_i32, %c0_i32_0 : i32, i32
  }
  func.func @transform_4(%arg0: i32) -> (i32, i32) {
    %c0_i32 = arith.constant 0 : i32
    %c0_i32_0 = arith.constant 0 : i32
    %c0_i32_1 = arith.constant 0 : i32
    return %c0_i32, %c0_i32_0 : i32, i32
  }
  func.func @transform_5(%arg0: i32) -> (i32, i32) {
    %c0_i32 = arith.constant 0 : i32
    %c0_i32_0 = arith.constant 0 : i32
    %c0_i32_1 = arith.constant 0 : i32
    return %c0_i32, %c0_i32_0 : i32, i32
  }
  func.func @transform_6(%arg0: i32) -> (i32, i32) {
    %c0_i32 = arith.constant 0 : i32
    %c0_i32_0 = arith.constant 0 : i32
    %c0_i32_1 = arith.constant 0 : i32
    return %c0_i32, %c0_i32_0 : i32, i32
  }
  func.func @transform_7(%arg0: i32) -> (i32, i32) {
    %c0_i32 = arith.constant 0 : i32
    %c0_i32_0 = arith.constant 0 : i32
    %c0_i32_1 = arith.constant 0 : i32
    return %c0_i32, %c0_i32_0 : i32, i32
  }
  func.func @transform_8(%arg0: i32) -> (i32, i32) {
    %c0_i32 = arith.constant 0 : i32
    %c0_i32_0 = arith.constant 0 : i32
    %c0_i32_1 = arith.constant 0 : i32
    return %c0_i32, %c0_i32_0 : i32, i32
  }
  func.func @transform_9(%arg0: i32) -> (i32, i32) {
    %c0_i32 = arith.constant 0 : i32
    %c0_i32_0 = arith.constant 0 : i32
    return %c0_i32, %arg0 : i32, i32
  }
}

</mosaic_0001>

<llo_original>
// kernel: tpu_custom_call.1
$region0: #{tpu_custom_call.1}
  #allocation0 [shape = 'u32[]', space=smem, size = 0x4, offset = 0x4, fixed_abs, tag = 'smem constant byte address 0x4 - core index']
  #allocation1 [shape = 'u32[144,128]{1,0:T(1,128)}', space=vmem, size = 0x12000, scoped, tag = 'internal scratch']
  #allocation2 [shape = 'f32[1,1]{1,0:T(1,128)S(1)}', space=vmem, size = 0x200, scoped, tag = 'scoped memory for tpu_custom_call.1']
  %s0 = inlined_call_operand.vmem [shape: f32[2,128], index: 0, kind: input, shape index: {}]
  %s1 = inlined_call_operand.vmem [shape: f32[100,2], index: 1, kind: input, shape index: {}]
  %s2 = inlined_call_operand.vmem [shape: f32[100,1], index: 2, kind: input, shape index: {}]
  %s3 = inlined_call_operand.vmem [shape: f32[100,1], index: 3, kind: input, shape index: {}]
  %s4 = inlined_call_operand.<no memory space> [shape: f32[1,1], index: 4, kind: input, shape index: {}]
  %s5 = inlined_call_operand.vmem [shape: f32[100,1], index: 5, kind: input, shape index: {}]
  %s6 = inlined_call_operand.vmem [shape: f32[100,1], index: 6, kind: input, shape index: {}]
  %s7 = inlined_call_operand.vmem [shape: f32[2,100], index: 7, kind: input, shape index: {}]
  %s8 = inlined_call_operand.vmem [shape: f32[2,1], index: 8, kind: input, shape index: {}]
  %s9 = inlined_call_operand.hbm [shape: f32[2,128], index: 9, kind: output, shape index: {}]
  %s10 = sld [smem:[#allocation0]]
  $region46: #{tpu_custom_call.1} parent=0
    _
  %s12 = ssub.s32 1, %s10
  %s13 = scalar_select 0, %s12, %s10
  %v14 = vstv %s4
  %15 = vst [vmem:[#allocation2] sm:$0x1] %v14
  $region1: #{tpu_custom_call.1} parent=0
    #allocation3 [shape = 'u8[1024]{0}', space=vmem, size = 0x400, scoped, tag = 'output window, operand 0, single buffered']
    #allocation4 [shape = 's32[1]{0}', space=sflag, size = 0x4, scoped, tag = 'scoped memory for tpu_custom_call.1']
    %16 = vsyncpa [#allocation4], 0
    // Predicated region
    $region2: #{tpu_custom_call.1} parent=1 // pred_check
      _
    $region3: #{tpu_custom_call.1} parent=1 // pred_check_branch
      %18 = sbr.rel (0) target = $region5
    $region4: #{tpu_custom_call.1} parent=1 // pred_region
      _
    $region5: #{tpu_custom_call.1} parent=1 // pred_fallthru
      _
    // Predicated region
    $region6: #{tpu_custom_call.1} parent=1 // pred_check
      _
    $region7: #{tpu_custom_call.1} parent=1 // pred_check_branch
      %20 = sbr.rel (0) target = $region9
    $region8: #{tpu_custom_call.1} parent=1 // pred_region
      _
    $region9: #{tpu_custom_call.1} parent=1 // pred_fallthru
      _
    // Predicated region
    $region10: #{tpu_custom_call.1} parent=1 // pred_check
      _
    $region11: #{tpu_custom_call.1} parent=1 // pred_check_branch
      %22 = sbr.rel (0) target = $region13
    $region12: #{tpu_custom_call.1} parent=1 // pred_region
      _
    $region13: #{tpu_custom_call.1} parent=1 // pred_fallthru
      _
    // Predicated region
    $region14: #{tpu_custom_call.1} parent=1 // pred_check
      _
    $region15: #{tpu_custom_call.1} parent=1 // pred_check_branch
      %24 = sbr.rel (0) target = $region17
    $region16: #{tpu_custom_call.1} parent=1 // pred_region
      _
    $region17: #{tpu_custom_call.1} parent=1 // pred_fallthru
      _
    // Predicated region
    $region18: #{tpu_custom_call.1} parent=1 // pred_check
      _
    $region19: #{tpu_custom_call.1} parent=1 // pred_check_branch
      %26 = sbr.rel (0) target = $region21
    $region20: #{tpu_custom_call.1} parent=1 // pred_region
      _
    $region21: #{tpu_custom_call.1} parent=1 // pred_fallthru
      _
    // Predicated region
    $region22: #{tpu_custom_call.1} parent=1 // pred_check
      _
    $region23: #{tpu_custom_call.1} parent=1 // pred_check_branch
      %28 = sbr.rel (0) target = $region25
    $region24: #{tpu_custom_call.1} parent=1 // pred_region
      _
    $region25: #{tpu_custom_call.1} parent=1 // pred_fallthru
      _
    // Predicated region
    $region26: #{tpu_custom_call.1} parent=1 // pred_check
      _
    $region27: #{tpu_custom_call.1} parent=1 // pred_check_branch
      %30 = sbr.rel (0) target = $region29
    $region28: #{tpu_custom_call.1} parent=1 // pred_region
      _
    $region29: #{tpu_custom_call.1} parent=1 // pred_fallthru
      _
    // Predicated region
    $region30: #{tpu_custom_call.1} parent=1 // pred_check
      _
    $region31: #{tpu_custom_call.1} parent=1 // pred_check_branch
      %32 = sbr.rel (0) target = $region33
    $region32: #{tpu_custom_call.1} parent=1 // pred_region
      _
    $region33: #{tpu_custom_call.1} parent=1 // pred_fallthru
      _
    // Predicated region
    $region34: #{tpu_custom_call.1} parent=1 // pred_check
      _
    $region35: #{tpu_custom_call.1} parent=1 // pred_check_branch
      %34 = sbr.rel (0) target = $region37
    $region36: #{tpu_custom_call.1} parent=1 // pred_region
      _
    $region37: #{tpu_custom_call.1} parent=1 // pred_fallthru
      _
    %v35 = vld [vmem:[%s0] sm:$0x3]
    %v36 = vld [vmem:[%s1] sm:$0xff]
    %v37 = vld [vmem:[%s1 + $0x8] sm:$0xff]
    %v38 = vld [vmem:[%s1 + $0x10] sm:$0xff]
    %v39 = vld [vmem:[%s1 + $0x18] sm:$0xff]
    %v40 = vld [vmem:[%s1 + $0x20] sm:$0xff]
    %v41 = vld [vmem:[%s1 + $0x28] sm:$0xff]
    %v42 = vld [vmem:[%s1 + $0x30] sm:$0xff]
    %v43 = vld [vmem:[%s1 + $0x38] sm:$0xff]
    %v44 = vld [vmem:[%s1 + $0x40] sm:$0xff]
    %v45 = vld [vmem:[%s1 + $0x48] sm:$0xff]
    %v46 = vld [vmem:[%s1 + $0x50] sm:$0xff]
    %v47 = vld [vmem:[%s1 + $0x58] sm:$0xff]
    %v48 = vld [vmem:[%s1 + $0x60] sm:$0xf]
    %50 = vset.pattern.permute.xlu0 0
    %51 = vperm.xlu0 %50, %v36
    %v52 = vpop.permute.xlu0 %51
    %55 = vset.pattern.permute.xlu0 0
    %56 = vperm.xlu0 %55, %v37
    %v57 = vpop.permute.xlu0 %56
    %60 = vset.pattern.permute.xlu0 0
    %61 = vperm.xlu0 %60, %v38
    %v62 = vpop.permute.xlu0 %61
    %65 = vset.pattern.permute.xlu0 0
    %66 = vperm.xlu0 %65, %v39
    %v67 = vpop.permute.xlu0 %66
    %70 = vset.pattern.permute.xlu0 0
    %71 = vperm.xlu0 %70, %v40
    %v72 = vpop.permute.xlu0 %71
    %75 = vset.pattern.permute.xlu0 0
    %76 = vperm.xlu0 %75, %v41
    %v77 = vpop.permute.xlu0 %76
    %80 = vset.pattern.permute.xlu0 0
    %81 = vperm.xlu0 %80, %v42
    %v82 = vpop.permute.xlu0 %81
    %85 = vset.pattern.permute.xlu0 0
    %86 = vperm.xlu0 %85, %v43
    %v87 = vpop.permute.xlu0 %86
    %90 = vset.pattern.permute.xlu0 0
    %91 = vperm.xlu0 %90, %v44
    %v92 = vpop.permute.xlu0 %91
    %95 = vset.pattern.permute.xlu0 0
    %96 = vperm.xlu0 %95, %v45
    %v97 = vpop.permute.xlu0 %96
    %100 = vset.pattern.permute.xlu0 0
    %101 = vperm.xlu0 %100, %v46
    %v102 = vpop.permute.xlu0 %101
    %105 = vset.pattern.permute.xlu0 0
    %106 = vperm.xlu0 %105, %v47
    %v107 = vpop.permute.xlu0 %106
    %110 = vset.pattern.permute.xlu0 0
    %111 = vperm.xlu0 %110, %v48
    %v112 = vpop.permute.xlu0 %111
    %v114 = vlaneseq
    %v115 = vshrl.u32 %v114, 7
    %v116 = vsub.s32 0, %v115
    %v117 = vrot.slane %v35, %v116
    %v118 = vmul.f32 %v52, %v117
    %v119 = vmul.f32 %v57, %v117
    %v120 = vmul.f32 %v62, %v117
    %v121 = vmul.f32 %v67, %v117
    %v122 = vmul.f32 %v72, %v117
    %v123 = vmul.f32 %v77, %v117
    %v124 = vmul.f32 %v82, %v117
    %v125 = vmul.f32 %v87, %v117
    %v126 = vmul.f32 %v92, %v117
    %v127 = vmul.f32 %v97, %v117
    %v128 = vmul.f32 %v102, %v117
    %v129 = vmul.f32 %v107, %v117
    %v130 = vmul.f32 %v112, %v117
    %131 = vset.pattern.permute.xlu0 1
    %132 = vperm.xlu0 %131, %v36
    %v133 = vpop.permute.xlu0 %132
    %135 = vset.pattern.permute.xlu0 1
    %136 = vperm.xlu0 %135, %v37
    %v137 = vpop.permute.xlu0 %136
    %139 = vset.pattern.permute.xlu0 1
    %140 = vperm.xlu0 %139, %v38
    %v141 = vpop.permute.xlu0 %140
    %143 = vset.pattern.permute.xlu0 1
    %144 = vperm.xlu0 %143, %v39
    %v145 = vpop.permute.xlu0 %144
    %147 = vset.pattern.permute.xlu0 1
    %148 = vperm.xlu0 %147, %v40
    %v149 = vpop.permute.xlu0 %148
    %151 = vset.pattern.permute.xlu0 1
    %152 = vperm.xlu0 %151, %v41
    %v153 = vpop.permute.xlu0 %152
    %155 = vset.pattern.permute.xlu0 1
    %156 = vperm.xlu0 %155, %v42
    %v157 = vpop.permute.xlu0 %156
    %159 = vset.pattern.permute.xlu0 1
    %160 = vperm.xlu0 %159, %v43
    %v161 = vpop.permute.xlu0 %160
    %163 = vset.pattern.permute.xlu0 1
    %164 = vperm.xlu0 %163, %v44
    %v165 = vpop.permute.xlu0 %164
    %167 = vset.pattern.permute.xlu0 1
    %168 = vperm.xlu0 %167, %v45
    %v169 = vpop.permute.xlu0 %168
    %171 = vset.pattern.permute.xlu0 1
    %172 = vperm.xlu0 %171, %v46
    %v173 = vpop.permute.xlu0 %172
    %175 = vset.pattern.permute.xlu0 1
    %176 = vperm.xlu0 %175, %v47
    %v177 = vpop.permute.xlu0 %176
    %179 = vset.pattern.permute.xlu0 1
    %180 = vperm.xlu0 %179, %v48
    %v181 = vpop.permute.xlu0 %180
    %v183 = vlaneseq
    %v184 = vshrl.u32 %v183, 7
    %v185 = vsub.s32 1, %v184
    %v186 = vrot.slane %v35, %v185
    %v187 = vmul.f32 %v133, %v186
    %v188 = vmul.f32 %v137, %v186
    %v189 = vmul.f32 %v141, %v186
    %v190 = vmul.f32 %v145, %v186
    %v191 = vmul.f32 %v149, %v186
    %v192 = vmul.f32 %v153, %v186
    %v193 = vmul.f32 %v157, %v186
    %v194 = vmul.f32 %v161, %v186
    %v195 = vmul.f32 %v165, %v186
    %v196 = vmul.f32 %v169, %v186
    %v197 = vmul.f32 %v173, %v186
    %v198 = vmul.f32 %v177, %v186
    %v199 = vmul.f32 %v181, %v186
    %v200 = vadd.f32 %v118, %v187
    %v201 = vadd.f32 %v119, %v188
    %v202 = vadd.f32 %v120, %v189
    %v203 = vadd.f32 %v121, %v190
    %v204 = vadd.f32 %v122, %v191
    %v205 = vadd.f32 %v123, %v192
    %v206 = vadd.f32 %v124, %v193
    %v207 = vadd.f32 %v125, %v194
    %v208 = vadd.f32 %v126, %v195
    %v209 = vadd.f32 %v127, %v196
    %v210 = vadd.f32 %v128, %v197
    %v211 = vadd.f32 %v129, %v198
    %v212 = vadd.f32 %v130, %v199
    %v213 = vld [vmem:[%s2] sm:$0xff]
    %v214 = vld [vmem:[%s2 + $0x8] sm:$0xff]
    %v215 = vld [vmem:[%s2 + $0x10] sm:$0xff]
    %v216 = vld [vmem:[%s2 + $0x18] sm:$0xff]
    %v217 = vld [vmem:[%s2 + $0x20] sm:$0xff]
    %v218 = vld [vmem:[%s2 + $0x28] sm:$0xff]
    %v219 = vld [vmem:[%s2 + $0x30] sm:$0xff]
    %v220 = vld [vmem:[%s2 + $0x38] sm:$0xff]
    %v221 = vld [vmem:[%s2 + $0x40] sm:$0xff]
    %v222 = vld [vmem:[%s2 + $0x48] sm:$0xff]
    %v223 = vld [vmem:[%s2 + $0x50] sm:$0xff]
    %v224 = vld [vmem:[%s2 + $0x58] sm:$0xff]
    %v225 = vld [vmem:[%s2 + $0x60] sm:$0xf]
    %227 = vset.pattern.permute.xlu0 0
    %228 = vperm.xlu0 %227, %v213
    %v229 = vpop.permute.xlu0 %228
    %232 = vset.pattern.permute.xlu0 0
    %233 = vperm.xlu0 %232, %v214
    %v234 = vpop.permute.xlu0 %233
    %237 = vset.pattern.permute.xlu0 0
    %238 = vperm.xlu0 %237, %v215
    %v239 = vpop.permute.xlu0 %238
    %242 = vset.pattern.permute.xlu0 0
    %243 = vperm.xlu0 %242, %v216
    %v244 = vpop.permute.xlu0 %243
    %247 = vset.pattern.permute.xlu0 0
    %248 = vperm.xlu0 %247, %v217
    %v249 = vpop.permute.xlu0 %248
    %252 = vset.pattern.permute.xlu0 0
    %253 = vperm.xlu0 %252, %v218
    %v254 = vpop.permute.xlu0 %253
    %257 = vset.pattern.permute.xlu0 0
    %258 = vperm.xlu0 %257, %v219
    %v259 = vpop.permute.xlu0 %258
    %262 = vset.pattern.permute.xlu0 0
    %263 = vperm.xlu0 %262, %v220
    %v264 = vpop.permute.xlu0 %263
    %267 = vset.pattern.permute.xlu0 0
    %268 = vperm.xlu0 %267, %v221
    %v269 = vpop.permute.xlu0 %268
    %272 = vset.pattern.permute.xlu0 0
    %273 = vperm.xlu0 %272, %v222
    %v274 = vpop.permute.xlu0 %273
    %277 = vset.pattern.permute.xlu0 0
    %278 = vperm.xlu0 %277, %v223
    %v279 = vpop.permute.xlu0 %278
    %282 = vset.pattern.permute.xlu0 0
    %283 = vperm.xlu0 %282, %v224
    %v284 = vpop.permute.xlu0 %283
    %287 = vset.pattern.permute.xlu0 0
    %288 = vperm.xlu0 %287, %v225
    %v289 = vpop.permute.xlu0 %288
    %v291 = vadd.f32 %v200, %v229
    %v292 = vadd.f32 %v201, %v234
    %v293 = vadd.f32 %v202, %v239
    %v294 = vadd.f32 %v203, %v244
    %v295 = vadd.f32 %v204, %v249
    %v296 = vadd.f32 %v205, %v254
    %v297 = vadd.f32 %v206, %v259
    %v298 = vadd.f32 %v207, %v264
    %v299 = vadd.f32 %v208, %v269
    %v300 = vadd.f32 %v209, %v274
    %v301 = vadd.f32 %v210, %v279
    %v302 = vadd.f32 %v211, %v284
    %v303 = vadd.f32 %v212, %v289
    %vm304 = vcmp.gt.f32.partialorder %v291, 0.0
    %vm305 = vcmp.gt.f32.partialorder %v292, 0.0
    %vm306 = vcmp.gt.f32.partialorder %v293, 0.0
    %vm307 = vcmp.gt.f32.partialorder %v294, 0.0
    %vm308 = vcmp.gt.f32.partialorder %v295, 0.0
    %vm309 = vcmp.gt.f32.partialorder %v296, 0.0
    %vm310 = vcmp.gt.f32.partialorder %v297, 0.0
    %vm311 = vcmp.gt.f32.partialorder %v298, 0.0
    %vm312 = vcmp.gt.f32.partialorder %v299, 0.0
    %vm313 = vcmp.gt.f32.partialorder %v300, 0.0
    %vm314 = vcmp.gt.f32.partialorder %v301, 0.0
    %vm315 = vcmp.gt.f32.partialorder %v302, 0.0
    %vm316 = vcmp.gt.f32.partialorder %v303, 0.0
    %v317 = vmin.f32 %v291, 0.0
    %v318 = vmin.f32 %v292, 0.0
    %v319 = vmin.f32 %v293, 0.0
    %v320 = vmin.f32 %v294, 0.0
    %v321 = vmin.f32 %v295, 0.0
    %v322 = vmin.f32 %v296, 0.0
    %v323 = vmin.f32 %v297, 0.0
    %v324 = vmin.f32 %v298, 0.0
    %v325 = vmin.f32 %v299, 0.0
    %v326 = vmin.f32 %v300, 0.0
    %v327 = vmin.f32 %v301, 0.0
    %v328 = vmin.f32 %v302, 0.0
    %v329 = vmin.f32 %v303, 0.0
    %v330 = vmul.f32 %v317, 1.442695
    %v331 = vpow.pop %v330
    %v332 = vmul.f32 %v318, 1.442695
    %v333 = vpow.pop %v332
    %v334 = vmul.f32 %v319, 1.442695
    %v335 = vpow.pop %v334
    %v336 = vmul.f32 %v320, 1.442695
    %v337 = vpow.pop %v336
    %v338 = vmul.f32 %v321, 1.442695
    %v339 = vpow.pop %v338
    %v340 = vmul.f32 %v322, 1.442695
    %v341 = vpow.pop %v340
    %v342 = vmul.f32 %v323, 1.442695
    %v343 = vpow.pop %v342
    %v344 = vmul.f32 %v324, 1.442695
    %v345 = vpow.pop %v344
    %v346 = vmul.f32 %v325, 1.442695
    %v347 = vpow.pop %v346
    %v348 = vmul.f32 %v326, 1.442695
    %v349 = vpow.pop %v348
    %v350 = vmul.f32 %v327, 1.442695
    %v351 = vpow.pop %v350
    %v352 = vmul.f32 %v328, 1.442695
    %v353 = vpow.pop %v352
    %v354 = vmul.f32 %v329, 1.442695
    %v355 = vpow.pop %v354
    %v356 = vsub.f32 %v331, 1.0
    %v357 = vsub.f32 %v333, 1.0
    %v358 = vsub.f32 %v335, 1.0
    %v359 = vsub.f32 %v337, 1.0
    %v360 = vsub.f32 %v339, 1.0
    %v361 = vsub.f32 %v341, 1.0
    %v362 = vsub.f32 %v343, 1.0
    %v363 = vsub.f32 %v345, 1.0
    %v364 = vsub.f32 %v347, 1.0
    %v365 = vsub.f32 %v349, 1.0
    %v366 = vsub.f32 %v351, 1.0
    %v367 = vsub.f32 %v353, 1.0
    %v368 = vsub.f32 %v355, 1.0
    %v369 = vsel %vm304, %v291, %v356
    %v370 = vsel %vm305, %v292, %v357
    %v371 = vsel %vm306, %v293, %v358
    %v372 = vsel %vm307, %v294, %v359
    %v373 = vsel %vm308, %v295, %v360
    %v374 = vsel %vm309, %v296, %v361
    %v375 = vsel %vm310, %v297, %v362
    %v376 = vsel %vm311, %v298, %v363
    %v377 = vsel %vm312, %v299, %v364
    %v378 = vsel %vm313, %v300, %v365
    %v379 = vsel %vm314, %v301, %v366
    %v380 = vsel %vm315, %v302, %v367
    %v381 = vsel %vm316, %v303, %v368
    %v382 = vld [vmem:[%s3] sm:$0xff]
    %v383 = vld [vmem:[%s3 + $0x8] sm:$0xff]
    %v384 = vld [vmem:[%s3 + $0x10] sm:$0xff]
    %v385 = vld [vmem:[%s3 + $0x18] sm:$0xff]
    %v386 = vld [vmem:[%s3 + $0x20] sm:$0xff]
    %v387 = vld [vmem:[%s3 + $0x28] sm:$0xff]
    %v388 = vld [vmem:[%s3 + $0x30] sm:$0xff]
    %v389 = vld [vmem:[%s3 + $0x38] sm:$0xff]
    %v390 = vld [vmem:[%s3 + $0x40] sm:$0xff]
    %v391 = vld [vmem:[%s3 + $0x48] sm:$0xff]
    %v392 = vld [vmem:[%s3 + $0x50] sm:$0xff]
    %v393 = vld [vmem:[%s3 + $0x58] sm:$0xff]
    %v394 = vld [vmem:[%s3 + $0x60] sm:$0xf]
    %396 = vset.pattern.permute.xlu0 0
    %397 = vperm.xlu0 %396, %v382
    %v398 = vpop.permute.xlu0 %397
    %401 = vset.pattern.permute.xlu0 0
    %402 = vperm.xlu0 %401, %v383
    %v403 = vpop.permute.xlu0 %402
    %406 = vset.pattern.permute.xlu0 0
    %407 = vperm.xlu0 %406, %v384
    %v408 = vpop.permute.xlu0 %407
    %411 = vset.pattern.permute.xlu0 0
    %412 = vperm.xlu0 %411, %v385
    %v413 = vpop.permute.xlu0 %412
    %416 = vset.pattern.permute.xlu0 0
    %417 = vperm.xlu0 %416, %v386
    %v418 = vpop.permute.xlu0 %417
    %421 = vset.pattern.permute.xlu0 0
    %422 = vperm.xlu0 %421, %v387
    %v423 = vpop.permute.xlu0 %422
    %426 = vset.pattern.permute.xlu0 0
    %427 = vperm.xlu0 %426, %v388
    %v428 = vpop.permute.xlu0 %427
    %431 = vset.pattern.permute.xlu0 0
    %432 = vperm.xlu0 %431, %v389
    %v433 = vpop.permute.xlu0 %432
    %436 = vset.pattern.permute.xlu0 0
    %437 = vperm.xlu0 %436, %v390
    %v438 = vpop.permute.xlu0 %437
    %441 = vset.pattern.permute.xlu0 0
    %442 = vperm.xlu0 %441, %v391
    %v443 = vpop.permute.xlu0 %442
    %446 = vset.pattern.permute.xlu0 0
    %447 = vperm.xlu0 %446, %v392
    %v448 = vpop.permute.xlu0 %447
    %451 = vset.pattern.permute.xlu0 0
    %452 = vperm.xlu0 %451, %v393
    %v453 = vpop.permute.xlu0 %452
    %456 = vset.pattern.permute.xlu0 0
    %457 = vperm.xlu0 %456, %v394
    %v458 = vpop.permute.xlu0 %457
    %v460 = vmul.f32 %v369, %v398
    %v461 = vmul.f32 %v370, %v403
    %v462 = vmul.f32 %v371, %v408
    %v463 = vmul.f32 %v372, %v413
    %v464 = vmul.f32 %v373, %v418
    %v465 = vmul.f32 %v374, %v423
    %v466 = vmul.f32 %v375, %v428
    %v467 = vmul.f32 %v376, %v433
    %v468 = vmul.f32 %v377, %v438
    %v469 = vmul.f32 %v378, %v443
    %v470 = vmul.f32 %v379, %v448
    %v471 = vmul.f32 %v380, %v453
    %v472 = vmul.f32 %v381, %v458
    %v473 = vadd.f32 %v460, %v461
    %v474 = vadd.f32 %v473, %v462
    %v475 = vadd.f32 %v474, %v463
    %v476 = vadd.f32 %v475, %v464
    %v477 = vadd.f32 %v476, %v465
    %v478 = vadd.f32 %v477, %v466
    %v479 = vadd.f32 %v478, %v467
    %v480 = vadd.f32 %v479, %v468
    %v481 = vadd.f32 %v480, %v469
    %v482 = vadd.f32 %v481, %v470
    %v483 = vadd.f32 %v482, %v471
    %vm484 = vcmask 1043456
    %v485 = vsel %vm484, %v472, 0.0
    %v486 = vadd.f32 %v483, %v485
    %v487 = vrot.slane %v486, 4
    %v488 = vadd.f32 %v486, %v487
    %v489 = vrot.slane %v488, 2
    %v490 = vadd.f32 %v488, %v489
    %v491 = vrot.slane %v490, 1
    %v492 = vadd.f32 %v490, %v491
    %v493 = vld [vmem:[#allocation2] sm:$0x1]
    %495 = vset.pattern.permute.xlu0 0
    %496 = vperm.xlu0 %495, %v493
    %v497 = vpop.permute.xlu0 %496
    %v499 = vlaneseq
    %v500 = vshrl.u32 %v499, 7
    %v501 = vsub.s32 0, %v500
    %v502 = vrot.slane %v497, %v501
    %v503 = vadd.f32 %v492, %v502
    %v504 = vld [vmem:[%s5] sm:$0xff]
    %v505 = vld [vmem:[%s5 + $0x8] sm:$0xff]
    %v506 = vld [vmem:[%s5 + $0x10] sm:$0xff]
    %v507 = vld [vmem:[%s5 + $0x18] sm:$0xff]
    %v508 = vld [vmem:[%s5 + $0x20] sm:$0xff]
    %v509 = vld [vmem:[%s5 + $0x28] sm:$0xff]
    %v510 = vld [vmem:[%s5 + $0x30] sm:$0xff]
    %v511 = vld [vmem:[%s5 + $0x38] sm:$0xff]
    %v512 = vld [vmem:[%s5 + $0x40] sm:$0xff]
    %v513 = vld [vmem:[%s5 + $0x48] sm:$0xff]
    %v514 = vld [vmem:[%s5 + $0x50] sm:$0xff]
    %v515 = vld [vmem:[%s5 + $0x58] sm:$0xff]
    %v516 = vld [vmem:[%s5 + $0x60] sm:$0xf]
    %518 = vset.pattern.permute.xlu0 0
    %519 = vperm.xlu0 %518, %v504
    %v520 = vpop.permute.xlu0 %519
    %523 = vset.pattern.permute.xlu0 0
    %524 = vperm.xlu0 %523, %v505
    %v525 = vpop.permute.xlu0 %524
    %528 = vset.pattern.permute.xlu0 0
    %529 = vperm.xlu0 %528, %v506
    %v530 = vpop.permute.xlu0 %529
    %533 = vset.pattern.permute.xlu0 0
    %534 = vperm.xlu0 %533, %v507
    %v535 = vpop.permute.xlu0 %534
    %538 = vset.pattern.permute.xlu0 0
    %539 = vperm.xlu0 %538, %v508
    %v540 = vpop.permute.xlu0 %539
    %543 = vset.pattern.permute.xlu0 0
    %544 = vperm.xlu0 %543, %v509
    %v545 = vpop.permute.xlu0 %544
    %548 = vset.pattern.permute.xlu0 0
    %549 = vperm.xlu0 %548, %v510
    %v550 = vpop.permute.xlu0 %549
    %553 = vset.pattern.permute.xlu0 0
    %554 = vperm.xlu0 %553, %v511
    %v555 = vpop.permute.xlu0 %554
    %558 = vset.pattern.permute.xlu0 0
    %559 = vperm.xlu0 %558, %v512
    %v560 = vpop.permute.xlu0 %559
    %563 = vset.pattern.permute.xlu0 0
    %564 = vperm.xlu0 %563, %v513
    %v565 = vpop.permute.xlu0 %564
    %568 = vset.pattern.permute.xlu0 0
    %569 = vperm.xlu0 %568, %v514
    %v570 = vpop.permute.xlu0 %569
    %573 = vset.pattern.permute.xlu0 0
    %574 = vperm.xlu0 %573, %v515
    %v575 = vpop.permute.xlu0 %574
    %578 = vset.pattern.permute.xlu0 0
    %579 = vperm.xlu0 %578, %v516
    %v580 = vpop.permute.xlu0 %579
    %v582 = vmul.f32 %v520, %v503
    %v583 = vmul.f32 %v525, %v503
    %v584 = vmul.f32 %v530, %v503
    %v585 = vmul.f32 %v535, %v503
    %v586 = vmul.f32 %v540, %v503
    %v587 = vmul.f32 %v545, %v503
    %v588 = vmul.f32 %v550, %v503
    %v589 = vmul.f32 %v555, %v503
    %v590 = vmul.f32 %v560, %v503
    %v591 = vmul.f32 %v565, %v503
    %v592 = vmul.f32 %v570, %v503
    %v593 = vmul.f32 %v575, %v503
    %v594 = vmul.f32 %v580, %v503
    %v595 = vld [vmem:[%s6] sm:$0xff]
    %v596 = vld [vmem:[%s6 + $0x8] sm:$0xff]
    %v597 = vld [vmem:[%s6 + $0x10] sm:$0xff]
    %v598 = vld [vmem:[%s6 + $0x18] sm:$0xff]
    %v599 = vld [vmem:[%s6 + $0x20] sm:$0xff]
    %v600 = vld [vmem:[%s6 + $0x28] sm:$0xff]
    %v601 = vld [vmem:[%s6 + $0x30] sm:$0xff]
    %v602 = vld [vmem:[%s6 + $0x38] sm:$0xff]
    %v603 = vld [vmem:[%s6 + $0x40] sm:$0xff]
    %v604 = vld [vmem:[%s6 + $0x48] sm:$0xff]
    %v605 = vld [vmem:[%s6 + $0x50] sm:$0xff]
    %v606 = vld [vmem:[%s6 + $0x58] sm:$0xff]
    %v607 = vld [vmem:[%s6 + $0x60] sm:$0xf]
    %609 = vset.pattern.permute.xlu0 0
    %610 = vperm.xlu0 %609, %v595
    %v611 = vpop.permute.xlu0 %610
    %614 = vset.pattern.permute.xlu0 0
    %615 = vperm.xlu0 %614, %v596
    %v616 = vpop.permute.xlu0 %615
    %619 = vset.pattern.permute.xlu0 0
    %620 = vperm.xlu0 %619, %v597
    %v621 = vpop.permute.xlu0 %620
    %624 = vset.pattern.permute.xlu0 0
    %625 = vperm.xlu0 %624, %v598
    %v626 = vpop.permute.xlu0 %625
    %629 = vset.pattern.permute.xlu0 0
    %630 = vperm.xlu0 %629, %v599
    %v631 = vpop.permute.xlu0 %630
    %634 = vset.pattern.permute.xlu0 0
    %635 = vperm.xlu0 %634, %v600
    %v636 = vpop.permute.xlu0 %635
    %639 = vset.pattern.permute.xlu0 0
    %640 = vperm.xlu0 %639, %v601
    %v641 = vpop.permute.xlu0 %640
    %644 = vset.pattern.permute.xlu0 0
    %645 = vperm.xlu0 %644, %v602
    %v646 = vpop.permute.xlu0 %645
    %649 = vset.pattern.permute.xlu0 0
    %650 = vperm.xlu0 %649, %v603
    %v651 = vpop.permute.xlu0 %650
    %654 = vset.pattern.permute.xlu0 0
    %655 = vperm.xlu0 %654, %v604
    %v656 = vpop.permute.xlu0 %655
    %659 = vset.pattern.permute.xlu0 0
    %660 = vperm.xlu0 %659, %v605
    %v661 = vpop.permute.xlu0 %660
    %664 = vset.pattern.permute.xlu0 0
    %665 = vperm.xlu0 %664, %v606
    %v666 = vpop.permute.xlu0 %665
    %669 = vset.pattern.permute.xlu0 0
    %670 = vperm.xlu0 %669, %v607
    %v671 = vpop.permute.xlu0 %670
    %v673 = vadd.f32 %v582, %v611
    %v674 = vadd.f32 %v583, %v616
    %v675 = vadd.f32 %v584, %v621
    %v676 = vadd.f32 %v585, %v626
    %v677 = vadd.f32 %v586, %v631
    %v678 = vadd.f32 %v587, %v636
    %v679 = vadd.f32 %v588, %v641
    %v680 = vadd.f32 %v589, %v646
    %v681 = vadd.f32 %v590, %v651
    %v682 = vadd.f32 %v591, %v656
    %v683 = vadd.f32 %v592, %v661
    %v684 = vadd.f32 %v593, %v666
    %v685 = vadd.f32 %v594, %v671
    %vm686 = vcmp.gt.f32.partialorder %v673, 0.0
    %vm687 = vcmp.gt.f32.partialorder %v674, 0.0
    %vm688 = vcmp.gt.f32.partialorder %v675, 0.0
    %vm689 = vcmp.gt.f32.partialorder %v676, 0.0
    %vm690 = vcmp.gt.f32.partialorder %v677, 0.0
    %vm691 = vcmp.gt.f32.partialorder %v678, 0.0
    %vm692 = vcmp.gt.f32.partialorder %v679, 0.0
    %vm693 = vcmp.gt.f32.partialorder %v680, 0.0
    %vm694 = vcmp.gt.f32.partialorder %v681, 0.0
    %vm695 = vcmp.gt.f32.partialorder %v682, 0.0
    %vm696 = vcmp.gt.f32.partialorder %v683, 0.0
    %vm697 = vcmp.gt.f32.partialorder %v684, 0.0
    %vm698 = vcmp.gt.f32.partialorder %v685, 0.0
    %v699 = vmin.f32 %v673, 0.0
    %v700 = vmin.f32 %v674, 0.0
    %v701 = vmin.f32 %v675, 0.0
    %v702 = vmin.f32 %v676, 0.0
    %v703 = vmin.f32 %v677, 0.0
    %v704 = vmin.f32 %v678, 0.0
    %v705 = vmin.f32 %v679, 0.0
    %v706 = vmin.f32 %v680, 0.0
    %v707 = vmin.f32 %v681, 0.0
    %v708 = vmin.f32 %v682, 0.0
    %v709 = vmin.f32 %v683, 0.0
    %v710 = vmin.f32 %v684, 0.0
    %v711 = vmin.f32 %v685, 0.0
    %v712 = vmul.f32 %v699, 1.442695
    %v713 = vpow.pop %v712
    %v714 = vmul.f32 %v700, 1.442695
    %v715 = vpow.pop %v714
    %v716 = vmul.f32 %v701, 1.442695
    %v717 = vpow.pop %v716
    %v718 = vmul.f32 %v702, 1.442695
    %v719 = vpow.pop %v718
    %v720 = vmul.f32 %v703, 1.442695
    %v721 = vpow.pop %v720
    %v722 = vmul.f32 %v704, 1.442695
    %v723 = vpow.pop %v722
    %v724 = vmul.f32 %v705, 1.442695
    %v725 = vpow.pop %v724
    %v726 = vmul.f32 %v706, 1.442695
    %v727 = vpow.pop %v726
    %v728 = vmul.f32 %v707, 1.442695
    %v729 = vpow.pop %v728
    %v730 = vmul.f32 %v708, 1.442695
    %v731 = vpow.pop %v730
    %v732 = vmul.f32 %v709, 1.442695
    %v733 = vpow.pop %v732
    %v734 = vmul.f32 %v710, 1.442695
    %v735 = vpow.pop %v734
    %v736 = vmul.f32 %v711, 1.442695
    %v737 = vpow.pop %v736
    %v738 = vsub.f32 %v713, 1.0
    %v739 = vsub.f32 %v715, 1.0
    %v740 = vsub.f32 %v717, 1.0
    %v741 = vsub.f32 %v719, 1.0
    %v742 = vsub.f32 %v721, 1.0
    %v743 = vsub.f32 %v723, 1.0
    %v744 = vsub.f32 %v725, 1.0
    %v745 = vsub.f32 %v727, 1.0
    %v746 = vsub.f32 %v729, 1.0
    %v747 = vsub.f32 %v731, 1.0
    %v748 = vsub.f32 %v733, 1.0
    %v749 = vsub.f32 %v735, 1.0
    %v750 = vsub.f32 %v737, 1.0
    %v751 = vsel %vm686, %v673, %v738
    %v752 = vsel %vm687, %v674, %v739
    %v753 = vsel %vm688, %v675, %v740
    %v754 = vsel %vm689, %v676, %v741
    %v755 = vsel %vm690, %v677, %v742
    %v756 = vsel %vm691, %v678, %v743
    %v757 = vsel %vm692, %v679, %v744
    %v758 = vsel %vm693, %v680, %v745
    %v759 = vsel %vm694, %v681, %v746
    %v760 = vsel %vm695, %v682, %v747
    %v761 = vsel %vm696, %v683, %v748
    %v762 = vsel %vm697, %v684, %v749
    %v763 = vsel %vm698, %v685, %v750
    %v764 = vld [vmem:[%s7] sm:$0x3]
    %v765 = vld [vmem:[%s8] sm:$0x3]
    %767 = vset.pattern.permute.xlu0 0
    %768 = vperm.xlu0 %767, %v765
    %v769 = vpop.permute.xlu0 %768
    %vm771 = vcmask 818176
    %v773 = vsel %vm771, %v764, 0
    %v776 = vsel %vm484, %v763, 0
    %778 = vmatprep.subr.mxu0 0.0
    %779 = vmatpush1.msra.mxu0 0.0
    %780 = vmatprep.subr.mxu0 0.0
    %781 = vmatpush1.msra.mxu0 0.0
    %782 = vmatprep.subr.mxu0 0.0
    %783 = vmatpush1.msra.mxu0 0.0
    %784 = vmatprep.subr.mxu0 0.0
    %785 = vmatpush1.msra.mxu0 %v776
    %786 = vmatprep.subr.mxu0 0.0
    %787 = vmatpush1.msra.mxu0 %v762
    %788 = vmatprep.subr.mxu0 0.0
    %789 = vmatpush1.msra.mxu0 %v761
    %790 = vmatprep.subr.mxu0 0.0
    %791 = vmatpush1.msra.mxu0 %v760
    %792 = vmatprep.subr.mxu0 0.0
    %793 = vmatpush1.msra.mxu0 %v759
    %794 = vmatprep.subr.mxu0 0.0
    %795 = vmatpush1.msra.mxu0 %v758
    %796 = vmatprep.subr.mxu0 0.0
    %797 = vmatpush1.msra.mxu0 %v757
    %798 = vmatprep.subr.mxu0 0.0
    %799 = vmatpush1.msra.mxu0 %v756
    %800 = vmatprep.subr.mxu0 0.0
    %801 = vmatpush1.msra.mxu0 %v755
    %802 = vmatprep.subr.mxu0 0.0
    %803 = vmatpush1.msra.mxu0 %v754
    %804 = vmatprep.subr.mxu0 0.0
    %805 = vmatpush1.msra.mxu0 %v753
    %806 = vmatprep.subr.mxu0 0.0
    %807 = vmatpush1.msra.mxu0 %v752
    %808 = vmatprep.subr.mxu0 0.0
    %809 = vmatpush1.msra.mxu0 %v751
    %810 = vmatprep.subr.mxu0 0.0
    %811 = vmatpush2.msra.mxu0 0.0
    %812 = vmatprep.subr.mxu0 0.0
    %813 = vmatpush2.msra.mxu0 0.0
    %814 = vmatprep.subr.mxu0 0.0
    %815 = vmatpush2.msra.mxu0 0.0
    %816 = vmatprep.subr.mxu0 0.0
    %817 = vmatpush2.msra.mxu0 0.0
    %818 = vmatprep.subr.mxu0 0.0
    %819 = vmatpush2.msra.mxu0 0.0
    %820 = vmatprep.subr.mxu0 0.0
    %821 = vmatpush2.msra.mxu0 0.0
    %822 = vmatprep.subr.mxu0 0.0
    %823 = vmatpush2.msra.mxu0 0.0
    %824 = vmatprep.subr.mxu0 0.0
    %825 = vmatpush2.msra.mxu0 0.0
    %826 = vmatprep.subr.mxu0 0.0
    %827 = vmatpush2.msra.mxu0 0.0
    %828 = vmatprep.subr.mxu0 0.0
    %829 = vmatpush2.msra.mxu0 0.0
    %830 = vmatprep.subr.mxu0 0.0
    %831 = vmatpush2.msra.mxu0 0.0
    %832 = vmatprep.subr.mxu0 0.0
    %833 = vmatpush2.msra.mxu0 0.0
    %834 = vmatprep.subr.mxu0 0.0
    %835 = vmatpush2.msra.mxu0 0.0
    %836 = vmatprep.subr.mxu0 0.0
    %837 = vmatpush2.msra.mxu0 0.0
    %838 = vmatprep.subr.mxu0 0.0
    %839 = vmatpush2.msra.mxu0 0.0
    %840 = vmatprep.subr.mxu0 0.0
    %841 = vmatpush2.msra.mxu0 0.0
    %842 = vmatprep.mubr.f32.mxu0 0.0
    %843 = vmatmul.mubr.f32.gmra.mxu0 %v773
    %v844 = vpop.f32.mrf.mxu0
    %v845 = vadd.f32 %v769, %v844
    %v846 = vpop.f32.mrf.mxu0
    %847 = vdwg.mxu0
    %848 = vst [vmem:[#allocation3] sm:$0x3] %v845
    // Predicated region
    $region38: #{tpu_custom_call.1} parent=1 // pred_check
      _
    $region39: #{tpu_custom_call.1} parent=1 // pred_check_branch
      %850 = sbr.rel (0) target = $region41
    $region40: #{tpu_custom_call.1} parent=1 // pred_region
      %s852 = ssub.s32 32, 32
      %853 = vsyncadd [#allocation4], %s852
      %s855 = sshll.u32 [#allocation3], 4
      %s856 = int_to_ptr.vmem [resolvable:$true] %s855
      %858 = dma.vmem_to_hbm [thread:$0]  %s856, 32, %s9, [#allocation4]
    $region41: #{tpu_custom_call.1} parent=1 // pred_fallthru
      _
    // Predicated region
    $region42: #{tpu_custom_call.1} parent=1 // pred_check
      _
    $region43: #{tpu_custom_call.1} parent=1 // pred_check_branch
      %860 = sbr.rel (0) target = $region45
    $region44: #{tpu_custom_call.1} parent=1 // pred_region
      %861 = dma.done [#allocation4], 32
    $region45: #{tpu_custom_call.1} parent=1 // pred_fallthru
      _
    %862 = vsyncpa [#allocation4], 1

</llo_original>
